<compile_context>
chip_gen: v5e
topology: v5e:2x2
jax: 0.10.0
libtpu: 0.0.40
codegen_flags: <defaults>
</compile_context>

<pallas_src>
import math
import functools

import jax
import jax.numpy as jnp
from jax.experimental import pallas as pl
from jax.experimental.pallas import tpu as pltpu

# ----- "TransformerConfig" (small, deterministic) -----
HIDDEN = 32            # config.hidden_size
NUM_HEADS = 4          # config.num_attention_heads
KV_CHANNELS = 8        # config.kv_channels (head dim)
NUM_QUERY_GROUPS = 4   # config.num_query_groups (== NUM_HEADS -> no GQA)
SEQ = 8
BATCH = 2
QUERY_PROJ = KV_CHANNELS * NUM_HEADS          # query_projection_size = 32
KV_PROJ = KV_CHANNELS * NUM_QUERY_GROUPS      # kv_projection_size    = 32
QKV_OUT = QUERY_PROJ + 2 * KV_PROJ            # fused qkv output size = 96


# ------------------------- fused Pallas kernel -------------------------

def _fused_attention_kernel(x_ref, wqkv_ref, bqkv_ref, bias_ref, wproj_ref, o_ref,
                            *, scale, tokens, num_heads, head_dim):
    """Fused QKV projection + masked-softmax attention + output projection.

    x_ref    : [tokens, hidden]          tokens = seq*batch, row t = s*batch + bi
                                         (natural row-major flatten of Megatron [sq, b, h])
    wqkv_ref : [hidden, 3*nh*hd]         columns = [Q_all | K_all | V_all], head-major within block
    bqkv_ref : [1, 3*nh*hd]
    bias_ref : [1, tokens, tokens]       additive attention bias: -10000 at causal-masked
                                         AND cross-batch positions, 0 elsewhere
    wproj_ref: [nh*hd, hidden]           rows head-major (matches Megatron [np*hn] layout)
    o_ref    : [tokens, hidden]
    """
    x = x_ref[...]

    # --- get_query_key_value_tensors: fused QKV linear, bias added in-kernel ---
    qkv = jnp.dot(x, wqkv_ref[...], preferred_element_type=jnp.float32) + bqkv_ref[...]

    # --- head split without lane-dim reshapes or per-head slicing ---
    # (tokens, 3*nh*hd) -T-> (3*nh*hd, tokens) -reshape(sublane split)-> (3nh, hd, T)
    #                   -swap last two-> (3nh, T, hd); Q/K/V are free leading-dim slices.
    qkv_t = qkv.T.reshape(3 * num_heads, head_dim, tokens)
    qkv_t = jnp.transpose(qkv_t, (0, 2, 1))                      # (3*nh, T, hd)
    q = qkv_t[:num_heads]                                        # (nh, T, hd)
    k = qkv_t[num_heads:2 * num_heads]
    v = qkv_t[2 * num_heads:]

    # --- core_attention (DotProductAttention): all heads in one batched einsum pair ---
    s = jnp.einsum("hqd,hkd->hqk", q, k,
                   preferred_element_type=jnp.float32) * scale   # (nh, T, T)
    s = s + bias_ref[...]          # causal + cross-batch additive mask; broadcast ONCE

    m = jnp.max(s, axis=-1, keepdims=True)
    p = jnp.exp(s - m)
    denom = jnp.sum(p, axis=-1, keepdims=True)
    p = p * pl.reciprocal(denom, approx=True)                    # EUP slot instead of VALU divide
    # NOTE: approx reciprocal => softmax rows sum to 1 within ~1e-3; use exact divide if
    #       bit-level parity with the PyTorch reference is required.

    ctx = jnp.einsum("hqk,hkd->hqd", p, v,
                     preferred_element_type=jnp.float32)         # (nh, T, hd)

    # back to a lane-dense [tokens, nh*hd] slab (head-major columns, matches wproj rows):
    # swap last two dims, merge leading dims (minor untouched), one 2-D transpose.
    ctx2d = jnp.transpose(ctx, (0, 2, 1)).reshape(num_heads * head_dim, tokens).T

    # --- linear_proj (RowParallelLinear, skip_bias_add=True: bias returned by caller) ---
    out = jnp.dot(ctx2d, wproj_ref[...], preferred_element_type=jnp.float32)
    o_ref[...] = out.astype(o_ref.dtype)


def _fused_attention(x2d, w_qkv, b_qkv_row, attn_bias, w_proj, *,
                     tokens, num_heads, head_dim, hidden):
    kernel = functools.partial(
        _fused_attention_kernel,
        scale=1.0 / math.sqrt(head_dim),
        tokens=tokens, num_heads=num_heads, head_dim=head_dim)
    vmem = pltpu.MemorySpace.VMEM
    # Whole problem (activations + weights + intermediates, ~tens of KiB) fits in VMEM:
    # one block, no grid, no per-step pipeline overhead.  Explicit VMEM specs and the
    # vmem_limit hook are kept so the call is ready to grow a (parallel) grid later.
    return pl.pallas_call(
        kernel,
        out_shape=jax.ShapeDtypeStruct((tokens, hidden), x2d.dtype),
        in_specs=[pl.BlockSpec(memory_space=vmem)] * 5,
        out_specs=pl.BlockSpec(memory_space=vmem),
        compiler_params=pltpu.CompilerParams(vmem_limit_bytes=32 * 1024 * 1024),
    )(x2d, w_qkv, b_qkv_row, attn_bias, w_proj)


# ------------------------- forward wrapper -------------------------

def attention_forward(hidden_states, attention_mask, params):
    """Returns (output, bias) like Megatron Attention.forward (skip_bias_add=True)."""
    sq, b, H = hidden_states.shape
    tokens = sq * b

    # Free view: [sq, b, H] -> [sq*b, H], row t = s*b + bi.  No wrapper transpose.
    x2d = hidden_states.reshape(tokens, H)

    # Token-level additive mask bias (tiny, built once outside the kernel):
    #   masked iff causal-masked (mask==1) OR the query/key tokens belong to different
    #   batch elements (segment mask).  exp(-10000) underflows to exactly 0.0 in f32,
    #   so this is numerically identical to per-batch masked softmax.
    causal_tok = jnp.repeat(jnp.repeat(attention_mask, b, axis=0), b, axis=1) > 0.5
    b_idx = jnp.arange(tokens, dtype=jnp.int32) % b
    cross_batch = b_idx[:, None] != b_idx[None, :]
    attn_bias = jnp.where(jnp.logical_or(causal_tok, cross_batch),
                          jnp.float32(-10000.0), jnp.float32(0.0)).reshape(1, tokens, tokens)

    out2d = _fused_attention(
        x2d,
        params["w_qkv"],
        params["b_qkv"].reshape(1, -1),
        attn_bias,
        params["w_proj"],
        tokens=tokens, num_heads=NUM_HEADS, head_dim=KV_CHANNELS, hidden=HIDDEN)

    out = out2d.reshape(sq, b, HIDDEN)        # free view back to [sq, b, hidden]
    return out, params["b_proj"]              # bias NOT added (skip_bias_add)


def init_params(key):
    # w_qkv columns laid out as contiguous [Q_all | K_all | V_all] blocks (head-major,
    # head_dim-minor within each block).  Loading a Megatron interleaved-per-group
    # checkpoint would be a one-time column permutation at init.
    k1, k2, k3, k4 = jax.random.split(key, 4)
    return {
        "w_qkv": 0.02 * jax.random.normal(k1, (HIDDEN, QKV_OUT), jnp.float32),
        "b_qkv": 0.01 * jax.random.normal(k2, (QKV_OUT,), jnp.float32),
        "w_proj": 0.02 * jax.random.normal(k3, (QUERY_PROJ, HIDDEN), jnp.float32),
        "b_proj": 0.01 * jax.random.normal(k4, (HIDDEN,), jnp.float32),
    }


if __name__ == "__main__":
    key = jax.random.PRNGKey(0)
    kx, kp = jax.random.split(key)
    hidden_states = jax.random.normal(kx, (SEQ, BATCH, HIDDEN), jnp.float32)
    # causal attention mask: 1.0 where attention is NOT allowed
    attention_mask = jnp.triu(jnp.ones((SEQ, SEQ), jnp.float32), k=1)
    params = init_params(kp)

    output, bias = jax.jit(attention_forward)(hidden_states, attention_mask, params)
    jax.block_until_ready((output, bias))

    assert output.shape == (SEQ, BATCH, HIDDEN)
    assert bias.shape == (HIDDEN,)
    print("KERNEL_OK")
</pallas_src>

<mosaic_0001>
module attributes {stable_mosaic.version = 11 : i64} {
  func.func @_fused_attention_kernel(%arg0: memref<16x32xf32, #tpu.memory_space<vmem>>, %arg1: memref<32x96xf32, #tpu.memory_space<vmem>>, %arg2: memref<1x96xf32, #tpu.memory_space<vmem>>, %arg3: memref<1x16x16xf32, #tpu.memory_space<vmem>>, %arg4: memref<32x32xf32, #tpu.memory_space<vmem>>, %arg5: memref<16x32xf32, #tpu.memory_space<vmem>>) attributes {dimension_semantics = [], scalar_prefetch = 0 : i64, scratch_operands = 0 : i64, tpu.core_type = #tpu.core_type<tc>} {
    %c0 = arith.constant 0 : index
    %c0_0 = arith.constant 0 : index
    %0 = vector.load %arg0[%c0, %c0_0] : memref<16x32xf32, #tpu.memory_space<vmem>>, vector<16x32xf32>
    %c0_1 = arith.constant 0 : index
    %c0_2 = arith.constant 0 : index
    %1 = vector.load %arg1[%c0_1, %c0_2] : memref<32x96xf32, #tpu.memory_space<vmem>>, vector<32x96xf32>
    %cst = arith.constant dense<0.000000e+00> : vector<16x96xf32>
    %2 = tpu.matmul %0, %1, %cst {dimension_numbers = #tpu.dot_dimension_numbers<[1], [0], [0], [1], [0, 0, 1, 1], [], []>} : vector<16x32xf32>, vector<32x96xf32>, vector<16x96xf32> -> vector<16x96xf32>
    %c0_3 = arith.constant 0 : index
    %c0_4 = arith.constant 0 : index
    %3 = vector.load %arg2[%c0_3, %c0_4] : memref<1x96xf32, #tpu.memory_space<vmem>>, vector<1x96xf32>
    %4 = vector.broadcast %3 : vector<1x96xf32> to vector<16x96xf32>
    %5 = arith.addf %2, %4 : vector<16x96xf32>
    %6 = tpu.transpose %5, [1, 0] : vector<16x96xf32> -> vector<96x16xf32>
    %7 = vector.shape_cast %6 : vector<96x16xf32> to vector<12x8x16xf32>
    %8 = tpu.transpose %7, [0, 2, 1] : vector<12x8x16xf32> -> vector<12x16x8xf32>
    %9 = vector.extract_strided_slice %8 {offsets = [0, 0, 0], sizes = [4, 16, 8], strides = [1, 1, 1]} : vector<12x16x8xf32> to vector<4x16x8xf32>
    %10 = vector.extract_strided_slice %8 {offsets = [4, 0, 0], sizes = [4, 16, 8], strides = [1, 1, 1]} : vector<12x16x8xf32> to vector<4x16x8xf32>
    %11 = vector.extract_strided_slice %8 {offsets = [8, 0, 0], sizes = [4, 16, 8], strides = [1, 1, 1]} : vector<12x16x8xf32> to vector<4x16x8xf32>
    "tpu.trace_start"() <{level = 10 : i32, message = "hqd,hkd->hqk"}> : () -> ()
    %cst_5 = arith.constant dense<0.000000e+00> : vector<4x16x16xf32>
    %12 = tpu.matmul %9, %10, %cst_5 {dimension_numbers = #tpu.dot_dimension_numbers<[2], [2], [1], [1], [0, 0, 0, 1, 1, 1], [0], [0]>} : vector<4x16x8xf32>, vector<4x16x8xf32>, vector<4x16x16xf32> -> vector<4x16x16xf32>
    "tpu.trace_stop"() : () -> ()
    %cst_6 = arith.constant 0.353553385 : f32
    %13 = vector.broadcast %cst_6 : f32 to vector<4x16x16xf32>
    %14 = arith.mulf %12, %13 : vector<4x16x16xf32>
    %c0_7 = arith.constant 0 : index
    %c0_8 = arith.constant 0 : index
    %c0_9 = arith.constant 0 : index
    %15 = vector.load %arg3[%c0_7, %c0_8, %c0_9] : memref<1x16x16xf32, #tpu.memory_space<vmem>>, vector<1x16x16xf32>
    %16 = vector.broadcast %15 : vector<1x16x16xf32> to vector<4x16x16xf32>
    %17 = arith.addf %14, %16 : vector<4x16x16xf32>
    %cst_10 = arith.constant dense<0xFF800000> : vector<4x16xf32>
    %18 = vector.multi_reduction <maximumf>, %17, %cst_10 [2] : vector<4x16x16xf32> to vector<4x16xf32>
    %19 = vector.shape_cast %18 : vector<4x16xf32> to vector<4x16x1xf32>
    %20 = vector.broadcast %19 : vector<4x16x1xf32> to vector<4x16x16xf32>
    %21 = arith.subf %17, %20 : vector<4x16x16xf32>
    %22 = math.exp %21 : vector<4x16x16xf32>
    %cst_11 = arith.constant dense<0.000000e+00> : vector<4x16xf32>
    %23 = vector.multi_reduction <add>, %22, %cst_11 [2] : vector<4x16x16xf32> to vector<4x16xf32>
    %24 = vector.shape_cast %23 : vector<4x16xf32> to vector<4x16x1xf32>
    %25 = tpu.reciprocal %24 {approx = true} : vector<4x16x1xf32> -> vector<4x16x1xf32>
    %26 = vector.broadcast %25 : vector<4x16x1xf32> to vector<4x16x16xf32>
    %27 = arith.mulf %22, %26 : vector<4x16x16xf32>
    "tpu.trace_start"() <{level = 10 : i32, message = "hqk,hkd->hqd"}> : () -> ()
    %cst_12 = arith.constant dense<0.000000e+00> : vector<4x16x8xf32>
    %28 = tpu.matmul %27, %11, %cst_12 {dimension_numbers = #tpu.dot_dimension_numbers<[2], [1], [1], [2], [0, 0, 0, 1, 1, 2], [0], [0]>} : vector<4x16x16xf32>, vector<4x16x8xf32>, vector<4x16x8xf32> -> vector<4x16x8xf32>
    "tpu.trace_stop"() : () -> ()
    %29 = tpu.transpose %28, [0, 2, 1] : vector<4x16x8xf32> -> vector<4x8x16xf32>
    %30 = vector.shape_cast %29 : vector<4x8x16xf32> to vector<32x16xf32>
    %31 = tpu.transpose %30, [1, 0] : vector<32x16xf32> -> vector<16x32xf32>
    %c0_13 = arith.constant 0 : index
    %c0_14 = arith.constant 0 : index
    %32 = vector.load %arg4[%c0_13, %c0_14] : memref<32x32xf32, #tpu.memory_space<vmem>>, vector<32x32xf32>
    %cst_15 = arith.constant dense<0.000000e+00> : vector<16x32xf32>
    %33 = tpu.matmul %31, %32, %cst_15 {dimension_numbers = #tpu.dot_dimension_numbers<[1], [0], [0], [1], [0, 0, 1, 1], [], []>} : vector<16x32xf32>, vector<32x32xf32>, vector<16x32xf32> -> vector<16x32xf32>
    %c0_16 = arith.constant 0 : index
    %c0_17 = arith.constant 0 : index
    %34 = vector.load %arg5[%c0_16, %c0_17] : memref<16x32xf32, #tpu.memory_space<vmem>>, vector<16x32xf32>
    tpu.vector_store %arg5[%c0_16, %c0_17], %33 {strides = array<i32>} : memref<16x32xf32, #tpu.memory_space<vmem>>, vector<16x32xf32>,
    return
  }
}

</mosaic_0001>

<llo_original>
// kernel: attention_forward.1
$region0: #{attention_forward.1}
  #allocation0 [shape = 'u32[]', space=smem, size = 0x4, offset = 0x4, fixed_abs, tag = 'smem constant byte address 0x4 - core index']
  #allocation1 [shape = 'u32[72,128]{1,0:T(1,128)}', space=vmem, size = 0x9000, scoped, tag = 'internal scratch']
  %s0 = inlined_call_operand.vmem [shape: f32[16,32], index: 0, kind: input, shape index: {}]
  %s1 = inlined_call_operand.vmem [shape: f32[32,96], index: 1, kind: input, shape index: {}]
  %s2 = inlined_call_operand.vmem [shape: f32[1,96], index: 2, kind: input, shape index: {}]
  %s3 = inlined_call_operand.vmem [shape: f32[1,16,16], index: 3, kind: input, shape index: {}]
  %s4 = inlined_call_operand.vmem [shape: f32[32,32], index: 4, kind: input, shape index: {}]
  %s5 = inlined_call_operand.hbm [shape: f32[16,32], index: 5, kind: output, shape index: {}]
  %s6 = sld [smem:[#allocation0]]
  $region30: #{attention_forward.1} parent=0
    _
  %s8 = ssub.s32 1, %s6
  %s9 = scalar_select 0, %s8, %s6
  $region1: #{attention_forward.1} parent=0
    #allocation2 [shape = 'u8[8192]{0}', space=vmem, size = 0x2000, scoped, tag = 'output window, operand 0, single buffered']
    #allocation3 [shape = 's32[1]{0}', space=sflag, size = 0x4, scoped, tag = 'scoped memory for attention_forward.1']
    %10 = vsyncpa [#allocation3], 0
    // Predicated region
    $region2: #{attention_forward.1} parent=1 // pred_check
      _
    $region3: #{attention_forward.1} parent=1 // pred_check_branch
      %12 = sbr.rel (0) target = $region5
    $region4: #{attention_forward.1} parent=1 // pred_region
      _
    $region5: #{attention_forward.1} parent=1 // pred_fallthru
      _
    // Predicated region
    $region6: #{attention_forward.1} parent=1 // pred_check
      _
    $region7: #{attention_forward.1} parent=1 // pred_check_branch
      %14 = sbr.rel (0) target = $region9
    $region8: #{attention_forward.1} parent=1 // pred_region
      _
    $region9: #{attention_forward.1} parent=1 // pred_fallthru
      _
    // Predicated region
    $region10: #{attention_forward.1} parent=1 // pred_check
      _
    $region11: #{attention_forward.1} parent=1 // pred_check_branch
      %16 = sbr.rel (0) target = $region13
    $region12: #{attention_forward.1} parent=1 // pred_region
      _
    $region13: #{attention_forward.1} parent=1 // pred_fallthru
      _
    // Predicated region
    $region14: #{attention_forward.1} parent=1 // pred_check
      _
    $region15: #{attention_forward.1} parent=1 // pred_check_branch
      %18 = sbr.rel (0) target = $region17
    $region16: #{attention_forward.1} parent=1 // pred_region
      _
    $region17: #{attention_forward.1} parent=1 // pred_fallthru
      _
    // Predicated region
    $region18: #{attention_forward.1} parent=1 // pred_check
      _
    $region19: #{attention_forward.1} parent=1 // pred_check_branch
      %20 = sbr.rel (0) target = $region21
    $region20: #{attention_forward.1} parent=1 // pred_region
      _
    $region21: #{attention_forward.1} parent=1 // pred_fallthru
      _
    %v21 = vld [vmem:[%s0] sm:$0xff]
    %v22 = vld [vmem:[%s0 + $0x8] sm:$0xff]
    %v23 = vld [vmem:[%s1] sm:$0xff]
    %v24 = vld [vmem:[%s1 + $0x8] sm:$0xff]
    %v25 = vld [vmem:[%s1 + $0x10] sm:$0xff]
    %v26 = vld [vmem:[%s1 + $0x18] sm:$0xff]
    %v27 = vld [vmem:[%s2] sm:$0x1]
    %v29 = vperm.slane %v27, 0
    %vm31 = vcmask 261120
    %v33 = vsel %vm31, %v21, 0
    %v36 = vsel %vm31, %v22, 0
    %38 = vmatpush.msra.mxu0 0.0
    %39 = vmatpush.msra.mxu0 0.0
    %40 = vmatpush.msra.mxu0 0.0
    %41 = vmatpush.msra.mxu0 0.0
    %42 = vmatpush.msra.mxu0 0.0
    %43 = vmatpush.msra.mxu0 0.0
    %44 = vmatpush.msra.mxu0 0.0
    %45 = vmatpush.msra.mxu0 0.0
    %46 = vmatpush.msra.mxu0 0.0
    %47 = vmatpush.msra.mxu0 0.0
    %48 = vmatpush.msra.mxu0 0.0
    %49 = vmatpush.msra.mxu0 0.0
    %50 = vmatpush.msra.mxu0 %v26
    %51 = vmatpush.msra.mxu0 %v25
    %52 = vmatpush.msra.mxu0 %v24
    %53 = vmatpush.msra.mxu0 %v23
    %54 = vmatmul.f32.gmra.mxu0 %v33
    %v55 = vpop.f32.mrf.mxu0
    %v56 = vadd.f32 %v29, %v55
    %57 = vmatmul.f32.gmra.mxu0 %v36
    %v58 = vpop.f32.mrf.mxu0
    %v59 = vadd.f32 %v29, %v58
    %60 = vdwg.mxu0
    %61 = vxpose.xlu0.b32.start [1/16] %v56, 128
    %62 = vxpose.xlu0.b32.cont [2/16] %v59, 128
    %63 = vxpose.xlu0.b32.cont [3/16] 0.0, 128
    %64 = vxpose.xlu0.b32.cont [4/16] 0.0, 128
    %65 = vxpose.xlu0.b32.cont [5/16] 0.0, 128
    %66 = vxpose.xlu0.b32.cont [6/16] 0.0, 128
    %67 = vxpose.xlu0.b32.cont [7/16] 0.0, 128
    %68 = vxpose.xlu0.b32.cont [8/16] 0.0, 128
    %69 = vxpose.xlu0.b32.cont [9/16] 0.0, 128
    %70 = vxpose.xlu0.b32.cont [10/16] 0.0, 128
    %71 = vxpose.xlu0.b32.cont [11/16] 0.0, 128
    %72 = vxpose.xlu0.b32.cont [12/16] 0.0, 128
    %73 = vxpose.xlu0.b32.cont [13/16] 0.0, 128
    %74 = vxpose.xlu0.b32.cont [14/16] 0.0, 128
    %75 = vxpose.xlu0.b32.cont [15/16] 0.0, 128
    %76 = vxpose.xlu0.b32.end [16/16] 0.0, 128
    %v77 = vpop.trf.xlu0
    %v78 = vpop.trf.xlu0
    %v79 = vpop.trf.xlu0
    %v80 = vpop.trf.xlu0
    %v81 = vpop.trf.xlu0
    %v82 = vpop.trf.xlu0
    %v83 = vpop.trf.xlu0
    %v84 = vpop.trf.xlu0
    %v85 = vpop.trf.xlu0
    %v86 = vpop.trf.xlu0
    %v87 = vpop.trf.xlu0
    %v88 = vpop.trf.xlu0
    %v89 = vpop.trf.xlu0
    %v90 = vpop.trf.xlu0
    %v91 = vpop.trf.xlu0
    %v92 = vpop.trf.xlu0
    %93 = vxpose.xlu0.b32.start [1/16] %v77, 128
    %94 = vxpose.xlu0.b32.cont [2/16] 0.0, 128
    %95 = vxpose.xlu0.b32.cont [3/16] 0.0, 128
    %96 = vxpose.xlu0.b32.cont [4/16] 0.0, 128
    %97 = vxpose.xlu0.b32.cont [5/16] 0.0, 128
    %98 = vxpose.xlu0.b32.cont [6/16] 0.0, 128
    %99 = vxpose.xlu0.b32.cont [7/16] 0.0, 128
    %100 = vxpose.xlu0.b32.cont [8/16] 0.0, 128
    %101 = vxpose.xlu0.b32.cont [9/16] 0.0, 128
    %102 = vxpose.xlu0.b32.cont [10/16] 0.0, 128
    %103 = vxpose.xlu0.b32.cont [11/16] 0.0, 128
    %104 = vxpose.xlu0.b32.cont [12/16] 0.0, 128
    %105 = vxpose.xlu0.b32.cont [13/16] 0.0, 128
    %106 = vxpose.xlu0.b32.cont [14/16] 0.0, 128
    %107 = vxpose.xlu0.b32.cont [15/16] 0.0, 128
    %108 = vxpose.xlu0.b32.end [16/16] 0.0, 128
    %v109 = vpop.trf.xlu0
    %v110 = vpop.trf.xlu0
    %v111 = vpop.trf.xlu0
    %v112 = vpop.trf.xlu0
    %v113 = vpop.trf.xlu0
    %v114 = vpop.trf.xlu0
    %v115 = vpop.trf.xlu0
    %v116 = vpop.trf.xlu0
    %v117 = vpop.trf.xlu0
    %v118 = vpop.trf.xlu0
    %v119 = vpop.trf.xlu0
    %v120 = vpop.trf.xlu0
    %v121 = vpop.trf.xlu0
    %v122 = vpop.trf.xlu0
    %v123 = vpop.trf.xlu0
    %v124 = vpop.trf.xlu0
    %125 = vxpose.xlu0.b32.start [1/16] %v78, 128
    %126 = vxpose.xlu0.b32.cont [2/16] 0.0, 128
    %127 = vxpose.xlu0.b32.cont [3/16] 0.0, 128
    %128 = vxpose.xlu0.b32.cont [4/16] 0.0, 128
    %129 = vxpose.xlu0.b32.cont [5/16] 0.0, 128
    %130 = vxpose.xlu0.b32.cont [6/16] 0.0, 128
    %131 = vxpose.xlu0.b32.cont [7/16] 0.0, 128
    %132 = vxpose.xlu0.b32.cont [8/16] 0.0, 128
    %133 = vxpose.xlu0.b32.cont [9/16] 0.0, 128
    %134 = vxpose.xlu0.b32.cont [10/16] 0.0, 128
    %135 = vxpose.xlu0.b32.cont [11/16] 0.0, 128
    %136 = vxpose.xlu0.b32.cont [12/16] 0.0, 128
    %137 = vxpose.xlu0.b32.cont [13/16] 0.0, 128
    %138 = vxpose.xlu0.b32.cont [14/16] 0.0, 128
    %139 = vxpose.xlu0.b32.cont [15/16] 0.0, 128
    %140 = vxpose.xlu0.b32.end [16/16] 0.0, 128
    %v141 = vpop.trf.xlu0
    %v142 = vpop.trf.xlu0
    %v143 = vpop.trf.xlu0
    %v144 = vpop.trf.xlu0
    %v145 = vpop.trf.xlu0
    %v146 = vpop.trf.xlu0
    %v147 = vpop.trf.xlu0
    %v148 = vpop.trf.xlu0
    %v149 = vpop.trf.xlu0
    %v150 = vpop.trf.xlu0
    %v151 = vpop.trf.xlu0
    %v152 = vpop.trf.xlu0
    %v153 = vpop.trf.xlu0
    %v154 = vpop.trf.xlu0
    %v155 = vpop.trf.xlu0
    %v156 = vpop.trf.xlu0
    %157 = vxpose.xlu0.b32.start [1/16] %v79, 128
    %158 = vxpose.xlu0.b32.cont [2/16] 0.0, 128
    %159 = vxpose.xlu0.b32.cont [3/16] 0.0, 128
    %160 = vxpose.xlu0.b32.cont [4/16] 0.0, 128
    %161 = vxpose.xlu0.b32.cont [5/16] 0.0, 128
    %162 = vxpose.xlu0.b32.cont [6/16] 0.0, 128
    %163 = vxpose.xlu0.b32.cont [7/16] 0.0, 128
    %164 = vxpose.xlu0.b32.cont [8/16] 0.0, 128
    %165 = vxpose.xlu0.b32.cont [9/16] 0.0, 128
    %166 = vxpose.xlu0.b32.cont [10/16] 0.0, 128
    %167 = vxpose.xlu0.b32.cont [11/16] 0.0, 128
    %168 = vxpose.xlu0.b32.cont [12/16] 0.0, 128
    %169 = vxpose.xlu0.b32.cont [13/16] 0.0, 128
    %170 = vxpose.xlu0.b32.cont [14/16] 0.0, 128
    %171 = vxpose.xlu0.b32.cont [15/16] 0.0, 128
    %172 = vxpose.xlu0.b32.end [16/16] 0.0, 128
    %v173 = vpop.trf.xlu0
    %v174 = vpop.trf.xlu0
    %v175 = vpop.trf.xlu0
    %v176 = vpop.trf.xlu0
    %v177 = vpop.trf.xlu0
    %v178 = vpop.trf.xlu0
    %v179 = vpop.trf.xlu0
    %v180 = vpop.trf.xlu0
    %v181 = vpop.trf.xlu0
    %v182 = vpop.trf.xlu0
    %v183 = vpop.trf.xlu0
    %v184 = vpop.trf.xlu0
    %v185 = vpop.trf.xlu0
    %v186 = vpop.trf.xlu0
    %v187 = vpop.trf.xlu0
    %v188 = vpop.trf.xlu0
    %189 = vxpose.xlu0.b32.start [1/16] %v80, 128
    %190 = vxpose.xlu0.b32.cont [2/16] 0.0, 128
    %191 = vxpose.xlu0.b32.cont [3/16] 0.0, 128
    %192 = vxpose.xlu0.b32.cont [4/16] 0.0, 128
    %193 = vxpose.xlu0.b32.cont [5/16] 0.0, 128
    %194 = vxpose.xlu0.b32.cont [6/16] 0.0, 128
    %195 = vxpose.xlu0.b32.cont [7/16] 0.0, 128
    %196 = vxpose.xlu0.b32.cont [8/16] 0.0, 128
    %197 = vxpose.xlu0.b32.cont [9/16] 0.0, 128
    %198 = vxpose.xlu0.b32.cont [10/16] 0.0, 128
    %199 = vxpose.xlu0.b32.cont [11/16] 0.0, 128
    %200 = vxpose.xlu0.b32.cont [12/16] 0.0, 128
    %201 = vxpose.xlu0.b32.cont [13/16] 0.0, 128
    %202 = vxpose.xlu0.b32.cont [14/16] 0.0, 128
    %203 = vxpose.xlu0.b32.cont [15/16] 0.0, 128
    %204 = vxpose.xlu0.b32.end [16/16] 0.0, 128
    %v205 = vpop.trf.xlu0
    %v206 = vpop.trf.xlu0
    %v207 = vpop.trf.xlu0
    %v208 = vpop.trf.xlu0
    %v209 = vpop.trf.xlu0
    %v210 = vpop.trf.xlu0
    %v211 = vpop.trf.xlu0
    %v212 = vpop.trf.xlu0
    %v213 = vpop.trf.xlu0
    %v214 = vpop.trf.xlu0
    %v215 = vpop.trf.xlu0
    %v216 = vpop.trf.xlu0
    %v217 = vpop.trf.xlu0
    %v218 = vpop.trf.xlu0
    %v219 = vpop.trf.xlu0
    %v220 = vpop.trf.xlu0
    %221 = vxpose.xlu0.b32.start [1/16] %v81, 128
    %222 = vxpose.xlu0.b32.cont [2/16] 0.0, 128
    %223 = vxpose.xlu0.b32.cont [3/16] 0.0, 128
    %224 = vxpose.xlu0.b32.cont [4/16] 0.0, 128
    %225 = vxpose.xlu0.b32.cont [5/16] 0.0, 128
    %226 = vxpose.xlu0.b32.cont [6/16] 0.0, 128
    %227 = vxpose.xlu0.b32.cont [7/16] 0.0, 128
    %228 = vxpose.xlu0.b32.cont [8/16] 0.0, 128
    %229 = vxpose.xlu0.b32.cont [9/16] 0.0, 128
    %230 = vxpose.xlu0.b32.cont [10/16] 0.0, 128
    %231 = vxpose.xlu0.b32.cont [11/16] 0.0, 128
    %232 = vxpose.xlu0.b32.cont [12/16] 0.0, 128
    %233 = vxpose.xlu0.b32.cont [13/16] 0.0, 128
    %234 = vxpose.xlu0.b32.cont [14/16] 0.0, 128
    %235 = vxpose.xlu0.b32.cont [15/16] 0.0, 128
    %236 = vxpose.xlu0.b32.end [16/16] 0.0, 128
    %v237 = vpop.trf.xlu0
    %v238 = vpop.trf.xlu0
    %v239 = vpop.trf.xlu0
    %v240 = vpop.trf.xlu0
    %v241 = vpop.trf.xlu0
    %v242 = vpop.trf.xlu0
    %v243 = vpop.trf.xlu0
    %v244 = vpop.trf.xlu0
    %v245 = vpop.trf.xlu0
    %v246 = vpop.trf.xlu0
    %v247 = vpop.trf.xlu0
    %v248 = vpop.trf.xlu0
    %v249 = vpop.trf.xlu0
    %v250 = vpop.trf.xlu0
    %v251 = vpop.trf.xlu0
    %v252 = vpop.trf.xlu0
    %253 = vxpose.xlu0.b32.start [1/16] %v82, 128
    %254 = vxpose.xlu0.b32.cont [2/16] 0.0, 128
    %255 = vxpose.xlu0.b32.cont [3/16] 0.0, 128
    %256 = vxpose.xlu0.b32.cont [4/16] 0.0, 128
    %257 = vxpose.xlu0.b32.cont [5/16] 0.0, 128
    %258 = vxpose.xlu0.b32.cont [6/16] 0.0, 128
    %259 = vxpose.xlu0.b32.cont [7/16] 0.0, 128
    %260 = vxpose.xlu0.b32.cont [8/16] 0.0, 128
    %261 = vxpose.xlu0.b32.cont [9/16] 0.0, 128
    %262 = vxpose.xlu0.b32.cont [10/16] 0.0, 128
    %263 = vxpose.xlu0.b32.cont [11/16] 0.0, 128
    %264 = vxpose.xlu0.b32.cont [12/16] 0.0, 128
    %265 = vxpose.xlu0.b32.cont [13/16] 0.0, 128
    %266 = vxpose.xlu0.b32.cont [14/16] 0.0, 128
    %267 = vxpose.xlu0.b32.cont [15/16] 0.0, 128
    %268 = vxpose.xlu0.b32.end [16/16] 0.0, 128
    %v269 = vpop.trf.xlu0
    %v270 = vpop.trf.xlu0
    %v271 = vpop.trf.xlu0
    %v272 = vpop.trf.xlu0
    %v273 = vpop.trf.xlu0
    %v274 = vpop.trf.xlu0
    %v275 = vpop.trf.xlu0
    %v276 = vpop.trf.xlu0
    %v277 = vpop.trf.xlu0
    %v278 = vpop.trf.xlu0
    %v279 = vpop.trf.xlu0
    %v280 = vpop.trf.xlu0
    %v281 = vpop.trf.xlu0
    %v282 = vpop.trf.xlu0
    %v283 = vpop.trf.xlu0
    %v284 = vpop.trf.xlu0
    %285 = vxpose.xlu0.b32.start [1/16] %v83, 128
    %286 = vxpose.xlu0.b32.cont [2/16] 0.0, 128
    %287 = vxpose.xlu0.b32.cont [3/16] 0.0, 128
    %288 = vxpose.xlu0.b32.cont [4/16] 0.0, 128
    %289 = vxpose.xlu0.b32.cont [5/16] 0.0, 128
    %290 = vxpose.xlu0.b32.cont [6/16] 0.0, 128
    %291 = vxpose.xlu0.b32.cont [7/16] 0.0, 128
    %292 = vxpose.xlu0.b32.cont [8/16] 0.0, 128
    %293 = vxpose.xlu0.b32.cont [9/16] 0.0, 128
    %294 = vxpose.xlu0.b32.cont [10/16] 0.0, 128
    %295 = vxpose.xlu0.b32.cont [11/16] 0.0, 128
    %296 = vxpose.xlu0.b32.cont [12/16] 0.0, 128
    %297 = vxpose.xlu0.b32.cont [13/16] 0.0, 128
    %298 = vxpose.xlu0.b32.cont [14/16] 0.0, 128
    %299 = vxpose.xlu0.b32.cont [15/16] 0.0, 128
    %300 = vxpose.xlu0.b32.end [16/16] 0.0, 128
    %v301 = vpop.trf.xlu0
    %v302 = vpop.trf.xlu0
    %v303 = vpop.trf.xlu0
    %v304 = vpop.trf.xlu0
    %v305 = vpop.trf.xlu0
    %v306 = vpop.trf.xlu0
    %v307 = vpop.trf.xlu0
    %v308 = vpop.trf.xlu0
    %v309 = vpop.trf.xlu0
    %v310 = vpop.trf.xlu0
    %v311 = vpop.trf.xlu0
    %v312 = vpop.trf.xlu0
    %v313 = vpop.trf.xlu0
    %v314 = vpop.trf.xlu0
    %v315 = vpop.trf.xlu0
    %v316 = vpop.trf.xlu0
    %317 = vxpose.xlu0.b32.start [1/16] %v84, 128
    %318 = vxpose.xlu0.b32.cont [2/16] 0.0, 128
    %319 = vxpose.xlu0.b32.cont [3/16] 0.0, 128
    %320 = vxpose.xlu0.b32.cont [4/16] 0.0, 128
    %321 = vxpose.xlu0.b32.cont [5/16] 0.0, 128
    %322 = vxpose.xlu0.b32.cont [6/16] 0.0, 128
    %323 = vxpose.xlu0.b32.cont [7/16] 0.0, 128
    %324 = vxpose.xlu0.b32.cont [8/16] 0.0, 128
    %325 = vxpose.xlu0.b32.cont [9/16] 0.0, 128
    %326 = vxpose.xlu0.b32.cont [10/16] 0.0, 128
    %327 = vxpose.xlu0.b32.cont [11/16] 0.0, 128
    %328 = vxpose.xlu0.b32.cont [12/16] 0.0, 128
    %329 = vxpose.xlu0.b32.cont [13/16] 0.0, 128
    %330 = vxpose.xlu0.b32.cont [14/16] 0.0, 128
    %331 = vxpose.xlu0.b32.cont [15/16] 0.0, 128
    %332 = vxpose.xlu0.b32.end [16/16] 0.0, 128
    %v333 = vpop.trf.xlu0
    %v334 = vpop.trf.xlu0
    %v335 = vpop.trf.xlu0
    %v336 = vpop.trf.xlu0
    %v337 = vpop.trf.xlu0
    %v338 = vpop.trf.xlu0
    %v339 = vpop.trf.xlu0
    %v340 = vpop.trf.xlu0
    %v341 = vpop.trf.xlu0
    %v342 = vpop.trf.xlu0
    %v343 = vpop.trf.xlu0
    %v344 = vpop.trf.xlu0
    %v345 = vpop.trf.xlu0
    %v346 = vpop.trf.xlu0
    %v347 = vpop.trf.xlu0
    %v348 = vpop.trf.xlu0
    %349 = vxpose.xlu0.b32.start [1/16] %v85, 128
    %350 = vxpose.xlu0.b32.cont [2/16] 0.0, 128
    %351 = vxpose.xlu0.b32.cont [3/16] 0.0, 128
    %352 = vxpose.xlu0.b32.cont [4/16] 0.0, 128
    %353 = vxpose.xlu0.b32.cont [5/16] 0.0, 128
    %354 = vxpose.xlu0.b32.cont [6/16] 0.0, 128
    %355 = vxpose.xlu0.b32.cont [7/16] 0.0, 128
    %356 = vxpose.xlu0.b32.cont [8/16] 0.0, 128
    %357 = vxpose.xlu0.b32.cont [9/16] 0.0, 128
    %358 = vxpose.xlu0.b32.cont [10/16] 0.0, 128
    %359 = vxpose.xlu0.b32.cont [11/16] 0.0, 128
    %360 = vxpose.xlu0.b32.cont [12/16] 0.0, 128
    %361 = vxpose.xlu0.b32.cont [13/16] 0.0, 128
    %362 = vxpose.xlu0.b32.cont [14/16] 0.0, 128
    %363 = vxpose.xlu0.b32.cont [15/16] 0.0, 128
    %364 = vxpose.xlu0.b32.end [16/16] 0.0, 128
    %v365 = vpop.trf.xlu0
    %v366 = vpop.trf.xlu0
    %v367 = vpop.trf.xlu0
    %v368 = vpop.trf.xlu0
    %v369 = vpop.trf.xlu0
    %v370 = vpop.trf.xlu0
    %v371 = vpop.trf.xlu0
    %v372 = vpop.trf.xlu0
    %v373 = vpop.trf.xlu0
    %v374 = vpop.trf.xlu0
    %v375 = vpop.trf.xlu0
    %v376 = vpop.trf.xlu0
    %v377 = vpop.trf.xlu0
    %v378 = vpop.trf.xlu0
    %v379 = vpop.trf.xlu0
    %v380 = vpop.trf.xlu0
    %381 = vxpose.xlu0.b32.start [1/16] %v86, 128
    %382 = vxpose.xlu0.b32.cont [2/16] 0.0, 128
    %383 = vxpose.xlu0.b32.cont [3/16] 0.0, 128
    %384 = vxpose.xlu0.b32.cont [4/16] 0.0, 128
    %385 = vxpose.xlu0.b32.cont [5/16] 0.0, 128
    %386 = vxpose.xlu0.b32.cont [6/16] 0.0, 128
    %387 = vxpose.xlu0.b32.cont [7/16] 0.0, 128
    %388 = vxpose.xlu0.b32.cont [8/16] 0.0, 128
    %389 = vxpose.xlu0.b32.cont [9/16] 0.0, 128
    %390 = vxpose.xlu0.b32.cont [10/16] 0.0, 128
    %391 = vxpose.xlu0.b32.cont [11/16] 0.0, 128
    %392 = vxpose.xlu0.b32.cont [12/16] 0.0, 128
    %393 = vxpose.xlu0.b32.cont [13/16] 0.0, 128
    %394 = vxpose.xlu0.b32.cont [14/16] 0.0, 128
    %395 = vxpose.xlu0.b32.cont [15/16] 0.0, 128
    %396 = vxpose.xlu0.b32.end [16/16] 0.0, 128
    %v397 = vpop.trf.xlu0
    %v398 = vpop.trf.xlu0
    %v399 = vpop.trf.xlu0
    %v400 = vpop.trf.xlu0
    %v401 = vpop.trf.xlu0
    %v402 = vpop.trf.xlu0
    %v403 = vpop.trf.xlu0
    %v404 = vpop.trf.xlu0
    %v405 = vpop.trf.xlu0
    %v406 = vpop.trf.xlu0
    %v407 = vpop.trf.xlu0
    %v408 = vpop.trf.xlu0
    %v409 = vpop.trf.xlu0
    %v410 = vpop.trf.xlu0
    %v411 = vpop.trf.xlu0
    %v412 = vpop.trf.xlu0
    %413 = vxpose.xlu0.b32.start [1/16] %v87, 128
    %414 = vxpose.xlu0.b32.cont [2/16] 0.0, 128
    %415 = vxpose.xlu0.b32.cont [3/16] 0.0, 128
    %416 = vxpose.xlu0.b32.cont [4/16] 0.0, 128
    %417 = vxpose.xlu0.b32.cont [5/16] 0.0, 128
    %418 = vxpose.xlu0.b32.cont [6/16] 0.0, 128
    %419 = vxpose.xlu0.b32.cont [7/16] 0.0, 128
    %420 = vxpose.xlu0.b32.cont [8/16] 0.0, 128
    %421 = vxpose.xlu0.b32.cont [9/16] 0.0, 128
    %422 = vxpose.xlu0.b32.cont [10/16] 0.0, 128
    %423 = vxpose.xlu0.b32.cont [11/16] 0.0, 128
    %424 = vxpose.xlu0.b32.cont [12/16] 0.0, 128
    %425 = vxpose.xlu0.b32.cont [13/16] 0.0, 128
    %426 = vxpose.xlu0.b32.cont [14/16] 0.0, 128
    %427 = vxpose.xlu0.b32.cont [15/16] 0.0, 128
    %428 = vxpose.xlu0.b32.end [16/16] 0.0, 128
    %v429 = vpop.trf.xlu0
    %v430 = vpop.trf.xlu0
    %v431 = vpop.trf.xlu0
    %v432 = vpop.trf.xlu0
    %v433 = vpop.trf.xlu0
    %v434 = vpop.trf.xlu0
    %v435 = vpop.trf.xlu0
    %v436 = vpop.trf.xlu0
    %v437 = vpop.trf.xlu0
    %v438 = vpop.trf.xlu0
    %v439 = vpop.trf.xlu0
    %v440 = vpop.trf.xlu0
    %v441 = vpop.trf.xlu0
    %v442 = vpop.trf.xlu0
    %v443 = vpop.trf.xlu0
    %v444 = vpop.trf.xlu0
    %445 = vxpose.xlu0.b32.start [1/16] %v88, 128
    %446 = vxpose.xlu0.b32.cont [2/16] 0.0, 128
    %447 = vxpose.xlu0.b32.cont [3/16] 0.0, 128
    %448 = vxpose.xlu0.b32.cont [4/16] 0.0, 128
    %449 = vxpose.xlu0.b32.cont [5/16] 0.0, 128
    %450 = vxpose.xlu0.b32.cont [6/16] 0.0, 128
    %451 = vxpose.xlu0.b32.cont [7/16] 0.0, 128
    %452 = vxpose.xlu0.b32.cont [8/16] 0.0, 128
    %453 = vxpose.xlu0.b32.cont [9/16] 0.0, 128
    %454 = vxpose.xlu0.b32.cont [10/16] 0.0, 128
    %455 = vxpose.xlu0.b32.cont [11/16] 0.0, 128
    %456 = vxpose.xlu0.b32.cont [12/16] 0.0, 128
    %457 = vxpose.xlu0.b32.cont [13/16] 0.0, 128
    %458 = vxpose.xlu0.b32.cont [14/16] 0.0, 128
    %459 = vxpose.xlu0.b32.cont [15/16] 0.0, 128
    %460 = vxpose.xlu0.b32.end [16/16] 0.0, 128
    %v461 = vpop.trf.xlu0
    %v462 = vpop.trf.xlu0
    %v463 = vpop.trf.xlu0
    %v464 = vpop.trf.xlu0
    %v465 = vpop.trf.xlu0
    %v466 = vpop.trf.xlu0
    %v467 = vpop.trf.xlu0
    %v468 = vpop.trf.xlu0
    %v469 = vpop.trf.xlu0
    %v470 = vpop.trf.xlu0
    %v471 = vpop.trf.xlu0
    %v472 = vpop.trf.xlu0
    %v473 = vpop.trf.xlu0
    %v474 = vpop.trf.xlu0
    %v475 = vpop.trf.xlu0
    %v476 = vpop.trf.xlu0
    %vm477 = vcmask 64512
    %v479 = vsel %vm477, %v109, 0
    %v482 = vsel %vm477, %v110, 0
    %v485 = vsel %vm477, %v237, 0
    %v488 = vsel %vm477, %v238, 0
    %490 = vmatpush.xpose.msra.mxu0 0.0
    %491 = vmatpush.xpose.msra.mxu0 0.0
    %492 = vmatpush.xpose.msra.mxu0 0.0
    %493 = vmatpush.xpose.msra.mxu0 0.0
    %494 = vmatpush.xpose.msra.mxu0 0.0
    %495 = vmatpush.xpose.msra.mxu0 0.0
    %496 = vmatpush.xpose.msra.mxu0 0.0
    %497 = vmatpush.xpose.msra.mxu0 0.0
    %498 = vmatpush.xpose.msra.mxu0 0.0
    %499 = vmatpush.xpose.msra.mxu0 0.0
    %500 = vmatpush.xpose.msra.mxu0 0.0
    %501 = vmatpush.xpose.msra.mxu0 0.0
    %502 = vmatpush.xpose.msra.mxu0 0.0
    %503 = vmatpush.xpose.msra.mxu0 0.0
    %504 = vmatpush.xpose.msra.mxu0 %v488
    %505 = vmatpush.xpose.msra.mxu0 %v485
    %506 = vmatmul.f32.gmra.mxu0 %v479
    %v507 = vpop.f32.mrf.mxu0
    %v508 = vadd.f32 0.0, %v507
    %509 = vmatmul.f32.gmra.mxu0 %v482
    %v510 = vpop.f32.mrf.mxu0
    %v511 = vadd.f32 0.0, %v510
    %512 = vdwg.mxu0
    %v514 = vsel %vm477, %v141, 0
    %v517 = vsel %vm477, %v142, 0
    %v520 = vsel %vm477, %v269, 0
    %v523 = vsel %vm477, %v270, 0
    %525 = vmatpush.xpose.msra.mxu0 0.0
    %526 = vmatpush.xpose.msra.mxu0 0.0
    %527 = vmatpush.xpose.msra.mxu0 0.0
    %528 = vmatpush.xpose.msra.mxu0 0.0
    %529 = vmatpush.xpose.msra.mxu0 0.0
    %530 = vmatpush.xpose.msra.mxu0 0.0
    %531 = vmatpush.xpose.msra.mxu0 0.0
    %532 = vmatpush.xpose.msra.mxu0 0.0
    %533 = vmatpush.xpose.msra.mxu0 0.0
    %534 = vmatpush.xpose.msra.mxu0 0.0
    %535 = vmatpush.xpose.msra.mxu0 0.0
    %536 = vmatpush.xpose.msra.mxu0 0.0
    %537 = vmatpush.xpose.msra.mxu0 0.0
    %538 = vmatpush.xpose.msra.mxu0 0.0
    %539 = vmatpush.xpose.msra.mxu0 %v523
    %540 = vmatpush.xpose.msra.mxu0 %v520
    %541 = vmatmul.f32.gmra.mxu0 %v514
    %v542 = vpop.f32.mrf.mxu0
    %v543 = vadd.f32 0.0, %v542
    %544 = vmatmul.f32.gmra.mxu0 %v517
    %v545 = vpop.f32.mrf.mxu0
    %v546 = vadd.f32 0.0, %v545
    %547 = vdwg.mxu0
    %v549 = vsel %vm477, %v173, 0
    %v552 = vsel %vm477, %v174, 0
    %v555 = vsel %vm477, %v301, 0
    %v558 = vsel %vm477, %v302, 0
    %560 = vmatpush.xpose.msra.mxu0 0.0
    %561 = vmatpush.xpose.msra.mxu0 0.0
    %562 = vmatpush.xpose.msra.mxu0 0.0
    %563 = vmatpush.xpose.msra.mxu0 0.0
    %564 = vmatpush.xpose.msra.mxu0 0.0
    %565 = vmatpush.xpose.msra.mxu0 0.0
    %566 = vmatpush.xpose.msra.mxu0 0.0
    %567 = vmatpush.xpose.msra.mxu0 0.0
    %568 = vmatpush.xpose.msra.mxu0 0.0
    %569 = vmatpush.xpose.msra.mxu0 0.0
    %570 = vmatpush.xpose.msra.mxu0 0.0
    %571 = vmatpush.xpose.msra.mxu0 0.0
    %572 = vmatpush.xpose.msra.mxu0 0.0
    %573 = vmatpush.xpose.msra.mxu0 0.0
    %574 = vmatpush.xpose.msra.mxu0 %v558
    %575 = vmatpush.xpose.msra.mxu0 %v555
    %576 = vmatmul.f32.gmra.mxu0 %v549
    %v577 = vpop.f32.mrf.mxu0
    %v578 = vadd.f32 0.0, %v577
    %579 = vmatmul.f32.gmra.mxu0 %v552
    %v580 = vpop.f32.mrf.mxu0
    %v581 = vadd.f32 0.0, %v580
    %582 = vdwg.mxu0
    %v584 = vsel %vm477, %v205, 0
    %v587 = vsel %vm477, %v206, 0
    %v590 = vsel %vm477, %v333, 0
    %v593 = vsel %vm477, %v334, 0
    %595 = vmatpush.xpose.msra.mxu0 0.0
    %596 = vmatpush.xpose.msra.mxu0 0.0
    %597 = vmatpush.xpose.msra.mxu0 0.0
    %598 = vmatpush.xpose.msra.mxu0 0.0
    %599 = vmatpush.xpose.msra.mxu0 0.0
    %600 = vmatpush.xpose.msra.mxu0 0.0
    %601 = vmatpush.xpose.msra.mxu0 0.0
    %602 = vmatpush.xpose.msra.mxu0 0.0
    %603 = vmatpush.xpose.msra.mxu0 0.0
    %604 = vmatpush.xpose.msra.mxu0 0.0
    %605 = vmatpush.xpose.msra.mxu0 0.0
    %606 = vmatpush.xpose.msra.mxu0 0.0
    %607 = vmatpush.xpose.msra.mxu0 0.0
    %608 = vmatpush.xpose.msra.mxu0 0.0
    %609 = vmatpush.xpose.msra.mxu0 %v593
    %610 = vmatpush.xpose.msra.mxu0 %v590
    %611 = vmatmul.f32.gmra.mxu0 %v584
    %v612 = vpop.f32.mrf.mxu0
    %v613 = vadd.f32 0.0, %v612
    %614 = vmatmul.f32.gmra.mxu0 %v587
    %v615 = vpop.f32.mrf.mxu0
    %v616 = vadd.f32 0.0, %v615
    %617 = vdwg.mxu0
    %v618 = vmul.f32 %v508, 0.35355338
    %v619 = vmul.f32 %v511, 0.35355338
    %v620 = vmul.f32 %v543, 0.35355338
    %v621 = vmul.f32 %v546, 0.35355338
    %v622 = vmul.f32 %v578, 0.35355338
    %v623 = vmul.f32 %v581, 0.35355338
    %v624 = vmul.f32 %v613, 0.35355338
    %v625 = vmul.f32 %v616, 0.35355338
    %v626 = vld [vmem:[%s3] sm:$0xff]
    %v627 = vld [vmem:[%s3 + $0x8] sm:$0xff]
    %v628 = vadd.f32 %v618, %v626
    %v629 = vadd.f32 %v619, %v627
    %v630 = vadd.f32 %v620, %v626
    %v631 = vadd.f32 %v621, %v627
    %v632 = vadd.f32 %v622, %v626
    %v633 = vadd.f32 %v623, %v627
    %v634 = vadd.f32 %v624, %v626
    %v635 = vadd.f32 %v625, %v627
    %vm636 = vcmask 130048
    %v637 = vsel %vm636, %v628, -inf
    %638 = vmax.xlane.f32.xlu0 %v637
    %v639 = vpop.xlane.xlu0 %638
    %v640 = vsel %vm636, %v629, -inf
    %641 = vmax.xlane.f32.xlu0 %v640
    %v642 = vpop.xlane.xlu0 %641
    %v643 = vsel %vm636, %v630, -inf
    %644 = vmax.xlane.f32.xlu0 %v643
    %v645 = vpop.xlane.xlu0 %644
    %v646 = vsel %vm636, %v631, -inf
    %647 = vmax.xlane.f32.xlu0 %v646
    %v648 = vpop.xlane.xlu0 %647
    %v649 = vsel %vm636, %v632, -inf
    %650 = vmax.xlane.f32.xlu0 %v649
    %v651 = vpop.xlane.xlu0 %650
    %v652 = vsel %vm636, %v633, -inf
    %653 = vmax.xlane.f32.xlu0 %v652
    %v654 = vpop.xlane.xlu0 %653
    %v655 = vsel %vm636, %v634, -inf
    %656 = vmax.xlane.f32.xlu0 %v655
    %v657 = vpop.xlane.xlu0 %656
    %v658 = vsel %vm636, %v635, -inf
    %659 = vmax.xlane.f32.xlu0 %v658
    %v660 = vpop.xlane.xlu0 %659
    %v661 = vsub.f32 %v628, %v639
    %v662 = vsub.f32 %v629, %v642
    %v663 = vsub.f32 %v630, %v645
    %v664 = vsub.f32 %v631, %v648
    %v665 = vsub.f32 %v632, %v651
    %v666 = vsub.f32 %v633, %v654
    %v667 = vsub.f32 %v634, %v657
    %v668 = vsub.f32 %v635, %v660
    %v669 = vmul.f32 %v661, 1.442695
    %v670 = vpow.pop %v669
    %v671 = vmul.f32 %v662, 1.442695
    %v672 = vpow.pop %v671
    %v673 = vmul.f32 %v663, 1.442695
    %v674 = vpow.pop %v673
    %v675 = vmul.f32 %v664, 1.442695
    %v676 = vpow.pop %v675
    %v677 = vmul.f32 %v665, 1.442695
    %v678 = vpow.pop %v677
    %v679 = vmul.f32 %v666, 1.442695
    %v680 = vpow.pop %v679
    %v681 = vmul.f32 %v667, 1.442695
    %v682 = vpow.pop %v681
    %v683 = vmul.f32 %v668, 1.442695
    %v684 = vpow.pop %v683
    %v685 = vsel %vm636, %v670, 0.0
    %686 = vadd.xlane.f32.xlu0 %v685
    %v687 = vpop.xlane.xlu0 %686
    %v688 = vsel %vm636, %v672, 0.0
    %689 = vadd.xlane.f32.xlu0 %v688
    %v690 = vpop.xlane.xlu0 %689
    %v691 = vsel %vm636, %v674, 0.0
    %692 = vadd.xlane.f32.xlu0 %v691
    %v693 = vpop.xlane.xlu0 %692
    %v694 = vsel %vm636, %v676, 0.0
    %695 = vadd.xlane.f32.xlu0 %v694
    %v696 = vpop.xlane.xlu0 %695
    %v697 = vsel %vm636, %v678, 0.0
    %698 = vadd.xlane.f32.xlu0 %v697
    %v699 = vpop.xlane.xlu0 %698
    %v700 = vsel %vm636, %v680, 0.0
    %701 = vadd.xlane.f32.xlu0 %v700
    %v702 = vpop.xlane.xlu0 %701
    %v703 = vsel %vm636, %v682, 0.0
    %704 = vadd.xlane.f32.xlu0 %v703
    %v705 = vpop.xlane.xlu0 %704
    %v706 = vsel %vm636, %v684, 0.0
    %707 = vadd.xlane.f32.xlu0 %v706
    %v708 = vpop.xlane.xlu0 %707
    %v709 = vrcp.pop %v687
    %v710 = vrcp.pop %v690
    %v711 = vrcp.pop %v693
    %v712 = vrcp.pop %v696
    %v713 = vrcp.pop %v699
    %v714 = vrcp.pop %v702
    %v715 = vrcp.pop %v705
    %v716 = vrcp.pop %v708
    %v717 = vmul.f32 %v670, %v709
    %v718 = vmul.f32 %v672, %v710
    %v719 = vmul.f32 %v674, %v711
    %v720 = vmul.f32 %v676, %v712
    %v721 = vmul.f32 %v678, %v713
    %v722 = vmul.f32 %v680, %v714
    %v723 = vmul.f32 %v682, %v715
    %v724 = vmul.f32 %v684, %v716
    %v726 = vsel %vm636, %v717, 0
    %v729 = vsel %vm636, %v718, 0
    %731 = vmatpush.msra.mxu0 0.0
    %732 = vmatpush.msra.mxu0 0.0
    %733 = vmatpush.msra.mxu0 0.0
    %734 = vmatpush.msra.mxu0 0.0
    %735 = vmatpush.msra.mxu0 0.0
    %736 = vmatpush.msra.mxu0 0.0
    %737 = vmatpush.msra.mxu0 0.0
    %738 = vmatpush.msra.mxu0 0.0
    %739 = vmatpush.msra.mxu0 0.0
    %740 = vmatpush.msra.mxu0 0.0
    %741 = vmatpush.msra.mxu0 0.0
    %742 = vmatpush.msra.mxu0 0.0
    %743 = vmatpush.msra.mxu0 0.0
    %744 = vmatpush.msra.mxu0 0.0
    %745 = vmatpush.msra.mxu0 %v366
    %746 = vmatpush.msra.mxu0 %v365
    %747 = vmatmul.f32.gmra.mxu0 %v726
    %v748 = vpop.f32.mrf.mxu0
    %v749 = vadd.f32 0.0, %v748
    %750 = vmatmul.f32.gmra.mxu0 %v729
    %v751 = vpop.f32.mrf.mxu0
    %v752 = vadd.f32 0.0, %v751
    %753 = vdwg.mxu0
    %v755 = vsel %vm636, %v719, 0
    %v758 = vsel %vm636, %v720, 0
    %760 = vmatpush.msra.mxu0 0.0
    %761 = vmatpush.msra.mxu0 0.0
    %762 = vmatpush.msra.mxu0 0.0
    %763 = vmatpush.msra.mxu0 0.0
    %764 = vmatpush.msra.mxu0 0.0
    %765 = vmatpush.msra.mxu0 0.0
    %766 = vmatpush.msra.mxu0 0.0
    %767 = vmatpush.msra.mxu0 0.0
    %768 = vmatpush.msra.mxu0 0.0
    %769 = vmatpush.msra.mxu0 0.0
    %770 = vmatpush.msra.mxu0 0.0
    %771 = vmatpush.msra.mxu0 0.0
    %772 = vmatpush.msra.mxu0 0.0
    %773 = vmatpush.msra.mxu0 0.0
    %774 = vmatpush.msra.mxu0 %v398
    %775 = vmatpush.msra.mxu0 %v397
    %776 = vmatmul.f32.gmra.mxu0 %v755
    %v777 = vpop.f32.mrf.mxu0
    %v778 = vadd.f32 0.0, %v777
    %779 = vmatmul.f32.gmra.mxu0 %v758
    %v780 = vpop.f32.mrf.mxu0
    %v781 = vadd.f32 0.0, %v780
    %782 = vdwg.mxu0
    %v784 = vsel %vm636, %v721, 0
    %v787 = vsel %vm636, %v722, 0
    %789 = vmatpush.msra.mxu0 0.0
    %790 = vmatpush.msra.mxu0 0.0
    %791 = vmatpush.msra.mxu0 0.0
    %792 = vmatpush.msra.mxu0 0.0
    %793 = vmatpush.msra.mxu0 0.0
    %794 = vmatpush.msra.mxu0 0.0
    %795 = vmatpush.msra.mxu0 0.0
    %796 = vmatpush.msra.mxu0 0.0
    %797 = vmatpush.msra.mxu0 0.0
    %798 = vmatpush.msra.mxu0 0.0
    %799 = vmatpush.msra.mxu0 0.0
    %800 = vmatpush.msra.mxu0 0.0
    %801 = vmatpush.msra.mxu0 0.0
    %802 = vmatpush.msra.mxu0 0.0
    %803 = vmatpush.msra.mxu0 %v430
    %804 = vmatpush.msra.mxu0 %v429
    %805 = vmatmul.f32.gmra.mxu0 %v784
    %v806 = vpop.f32.mrf.mxu0
    %v807 = vadd.f32 0.0, %v806
    %808 = vmatmul.f32.gmra.mxu0 %v787
    %v809 = vpop.f32.mrf.mxu0
    %v810 = vadd.f32 0.0, %v809
    %811 = vdwg.mxu0
    %v813 = vsel %vm636, %v723, 0
    %v816 = vsel %vm636, %v724, 0
    %818 = vmatpush.msra.mxu0 0.0
    %819 = vmatpush.msra.mxu0 0.0
    %820 = vmatpush.msra.mxu0 0.0
    %821 = vmatpush.msra.mxu0 0.0
    %822 = vmatpush.msra.mxu0 0.0
    %823 = vmatpush.msra.mxu0 0.0
    %824 = vmatpush.msra.mxu0 0.0
    %825 = vmatpush.msra.mxu0 0.0
    %826 = vmatpush.msra.mxu0 0.0
    %827 = vmatpush.msra.mxu0 0.0
    %828 = vmatpush.msra.mxu0 0.0
    %829 = vmatpush.msra.mxu0 0.0
    %830 = vmatpush.msra.mxu0 0.0
    %831 = vmatpush.msra.mxu0 0.0
    %832 = vmatpush.msra.mxu0 %v462
    %833 = vmatpush.msra.mxu0 %v461
    %834 = vmatmul.f32.gmra.mxu0 %v813
    %v835 = vpop.f32.mrf.mxu0
    %v836 = vadd.f32 0.0, %v835
    %837 = vmatmul.f32.gmra.mxu0 %v816
    %v838 = vpop.f32.mrf.mxu0
    %v839 = vadd.f32 0.0, %v838
    %840 = vdwg.mxu0
    %841 = vxpose.xlu0.b32.start [1/16] %v749, 128
    %842 = vxpose.xlu0.b32.cont [2/16] %v752, 128
    %843 = vxpose.xlu0.b32.cont [3/16] 0.0, 128
    %844 = vxpose.xlu0.b32.cont [4/16] 0.0, 128
    %845 = vxpose.xlu0.b32.cont [5/16] 0.0, 128
    %846 = vxpose.xlu0.b32.cont [6/16] 0.0, 128
    %847 = vxpose.xlu0.b32.cont [7/16] 0.0, 128
    %848 = vxpose.xlu0.b32.cont [8/16] 0.0, 128
    %849 = vxpose.xlu0.b32.cont [9/16] 0.0, 128
    %850 = vxpose.xlu0.b32.cont [10/16] 0.0, 128
    %851 = vxpose.xlu0.b32.cont [11/16] 0.0, 128
    %852 = vxpose.xlu0.b32.cont [12/16] 0.0, 128
    %853 = vxpose.xlu0.b32.cont [13/16] 0.0, 128
    %854 = vxpose.xlu0.b32.cont [14/16] 0.0, 128
    %855 = vxpose.xlu0.b32.cont [15/16] 0.0, 128
    %856 = vxpose.xlu0.b32.end [16/16] 0.0, 128
    %v857 = vpop.trf.xlu0
    %v858 = vpop.trf.xlu0
    %v859 = vpop.trf.xlu0
    %v860 = vpop.trf.xlu0
    %v861 = vpop.trf.xlu0
    %v862 = vpop.trf.xlu0
    %v863 = vpop.trf.xlu0
    %v864 = vpop.trf.xlu0
    %v865 = vpop.trf.xlu0
    %v866 = vpop.trf.xlu0
    %v867 = vpop.trf.xlu0
    %v868 = vpop.trf.xlu0
    %v869 = vpop.trf.xlu0
    %v870 = vpop.trf.xlu0
    %v871 = vpop.trf.xlu0
    %v872 = vpop.trf.xlu0
    %873 = vxpose.xlu0.b32.start [1/16] %v778, 128
    %874 = vxpose.xlu0.b32.cont [2/16] %v781, 128
    %875 = vxpose.xlu0.b32.cont [3/16] 0.0, 128
    %876 = vxpose.xlu0.b32.cont [4/16] 0.0, 128
    %877 = vxpose.xlu0.b32.cont [5/16] 0.0, 128
    %878 = vxpose.xlu0.b32.cont [6/16] 0.0, 128
    %879 = vxpose.xlu0.b32.cont [7/16] 0.0, 128
    %880 = vxpose.xlu0.b32.cont [8/16] 0.0, 128
    %881 = vxpose.xlu0.b32.cont [9/16] 0.0, 128
    %882 = vxpose.xlu0.b32.cont [10/16] 0.0, 128
    %883 = vxpose.xlu0.b32.cont [11/16] 0.0, 128
    %884 = vxpose.xlu0.b32.cont [12/16] 0.0, 128
    %885 = vxpose.xlu0.b32.cont [13/16] 0.0, 128
    %886 = vxpose.xlu0.b32.cont [14/16] 0.0, 128
    %887 = vxpose.xlu0.b32.cont [15/16] 0.0, 128
    %888 = vxpose.xlu0.b32.end [16/16] 0.0, 128
    %v889 = vpop.trf.xlu0
    %v890 = vpop.trf.xlu0
    %v891 = vpop.trf.xlu0
    %v892 = vpop.trf.xlu0
    %v893 = vpop.trf.xlu0
    %v894 = vpop.trf.xlu0
    %v895 = vpop.trf.xlu0
    %v896 = vpop.trf.xlu0
    %v897 = vpop.trf.xlu0
    %v898 = vpop.trf.xlu0
    %v899 = vpop.trf.xlu0
    %v900 = vpop.trf.xlu0
    %v901 = vpop.trf.xlu0
    %v902 = vpop.trf.xlu0
    %v903 = vpop.trf.xlu0
    %v904 = vpop.trf.xlu0
    %905 = vxpose.xlu0.b32.start [1/16] %v807, 128
    %906 = vxpose.xlu0.b32.cont [2/16] %v810, 128
    %907 = vxpose.xlu0.b32.cont [3/16] 0.0, 128
    %908 = vxpose.xlu0.b32.cont [4/16] 0.0, 128
    %909 = vxpose.xlu0.b32.cont [5/16] 0.0, 128
    %910 = vxpose.xlu0.b32.cont [6/16] 0.0, 128
    %911 = vxpose.xlu0.b32.cont [7/16] 0.0, 128
    %912 = vxpose.xlu0.b32.cont [8/16] 0.0, 128
    %913 = vxpose.xlu0.b32.cont [9/16] 0.0, 128
    %914 = vxpose.xlu0.b32.cont [10/16] 0.0, 128
    %915 = vxpose.xlu0.b32.cont [11/16] 0.0, 128
    %916 = vxpose.xlu0.b32.cont [12/16] 0.0, 128
    %917 = vxpose.xlu0.b32.cont [13/16] 0.0, 128
    %918 = vxpose.xlu0.b32.cont [14/16] 0.0, 128
    %919 = vxpose.xlu0.b32.cont [15/16] 0.0, 128
    %920 = vxpose.xlu0.b32.end [16/16] 0.0, 128
    %v921 = vpop.trf.xlu0
    %v922 = vpop.trf.xlu0
    %v923 = vpop.trf.xlu0
    %v924 = vpop.trf.xlu0
    %v925 = vpop.trf.xlu0
    %v926 = vpop.trf.xlu0
    %v927 = vpop.trf.xlu0
    %v928 = vpop.trf.xlu0
    %v929 = vpop.trf.xlu0
    %v930 = vpop.trf.xlu0
    %v931 = vpop.trf.xlu0
    %v932 = vpop.trf.xlu0
    %v933 = vpop.trf.xlu0
    %v934 = vpop.trf.xlu0
    %v935 = vpop.trf.xlu0
    %v936 = vpop.trf.xlu0
    %937 = vxpose.xlu0.b32.start [1/16] %v836, 128
    %938 = vxpose.xlu0.b32.cont [2/16] %v839, 128
    %939 = vxpose.xlu0.b32.cont [3/16] 0.0, 128
    %940 = vxpose.xlu0.b32.cont [4/16] 0.0, 128
    %941 = vxpose.xlu0.b32.cont [5/16] 0.0, 128
    %942 = vxpose.xlu0.b32.cont [6/16] 0.0, 128
    %943 = vxpose.xlu0.b32.cont [7/16] 0.0, 128
    %944 = vxpose.xlu0.b32.cont [8/16] 0.0, 128
    %945 = vxpose.xlu0.b32.cont [9/16] 0.0, 128
    %946 = vxpose.xlu0.b32.cont [10/16] 0.0, 128
    %947 = vxpose.xlu0.b32.cont [11/16] 0.0, 128
    %948 = vxpose.xlu0.b32.cont [12/16] 0.0, 128
    %949 = vxpose.xlu0.b32.cont [13/16] 0.0, 128
    %950 = vxpose.xlu0.b32.cont [14/16] 0.0, 128
    %951 = vxpose.xlu0.b32.cont [15/16] 0.0, 128
    %952 = vxpose.xlu0.b32.end [16/16] 0.0, 128
    %v953 = vpop.trf.xlu0
    %v954 = vpop.trf.xlu0
    %v955 = vpop.trf.xlu0
    %v956 = vpop.trf.xlu0
    %v957 = vpop.trf.xlu0
    %v958 = vpop.trf.xlu0
    %v959 = vpop.trf.xlu0
    %v960 = vpop.trf.xlu0
    %v961 = vpop.trf.xlu0
    %v962 = vpop.trf.xlu0
    %v963 = vpop.trf.xlu0
    %v964 = vpop.trf.xlu0
    %v965 = vpop.trf.xlu0
    %v966 = vpop.trf.xlu0
    %v967 = vpop.trf.xlu0
    %v968 = vpop.trf.xlu0
    %969 = vxpose.xlu0.b32.start [1/16] %v857, 128
    %970 = vxpose.xlu0.b32.cont [2/16] %v889, 128
    %971 = vxpose.xlu0.b32.cont [3/16] %v921, 128
    %972 = vxpose.xlu0.b32.cont [4/16] %v953, 128
    %973 = vxpose.xlu0.b32.cont [5/16] 0.0, 128
    %974 = vxpose.xlu0.b32.cont [6/16] 0.0, 128
    %975 = vxpose.xlu0.b32.cont [7/16] 0.0, 128
    %976 = vxpose.xlu0.b32.cont [8/16] 0.0, 128
    %977 = vxpose.xlu0.b32.cont [9/16] 0.0, 128
    %978 = vxpose.xlu0.b32.cont [10/16] 0.0, 128
    %979 = vxpose.xlu0.b32.cont [11/16] 0.0, 128
    %980 = vxpose.xlu0.b32.cont [12/16] 0.0, 128
    %981 = vxpose.xlu0.b32.cont [13/16] 0.0, 128
    %982 = vxpose.xlu0.b32.cont [14/16] 0.0, 128
    %983 = vxpose.xlu0.b32.cont [15/16] 0.0, 128
    %984 = vxpose.xlu0.b32.end [16/16] 0.0, 128
    %v985 = vpop.trf.xlu0
    %v986 = vpop.trf.xlu0
    %v987 = vpop.trf.xlu0
    %v988 = vpop.trf.xlu0
    %v989 = vpop.trf.xlu0
    %v990 = vpop.trf.xlu0
    %v991 = vpop.trf.xlu0
    %v992 = vpop.trf.xlu0
    %v993 = vpop.trf.xlu0
    %v994 = vpop.trf.xlu0
    %v995 = vpop.trf.xlu0
    %v996 = vpop.trf.xlu0
    %v997 = vpop.trf.xlu0
    %v998 = vpop.trf.xlu0
    %v999 = vpop.trf.xlu0
    %v1000 = vpop.trf.xlu0
    %v1001 = vld [vmem:[%s4] sm:$0xff]
    %v1002 = vld [vmem:[%s4 + $0x8] sm:$0xff]
    %v1003 = vld [vmem:[%s4 + $0x10] sm:$0xff]
    %v1004 = vld [vmem:[%s4 + $0x18] sm:$0xff]
    %v1006 = vsel %vm31, %v985, 0
    %v1009 = vsel %vm31, %v986, 0
    %1011 = vmatpush.msra.mxu0 0.0
    %1012 = vmatpush.msra.mxu0 0.0
    %1013 = vmatpush.msra.mxu0 0.0
    %1014 = vmatpush.msra.mxu0 0.0
    %1015 = vmatpush.msra.mxu0 0.0
    %1016 = vmatpush.msra.mxu0 0.0
    %1017 = vmatpush.msra.mxu0 0.0
    %1018 = vmatpush.msra.mxu0 0.0
    %1019 = vmatpush.msra.mxu0 0.0
    %1020 = vmatpush.msra.mxu0 0.0
    %1021 = vmatpush.msra.mxu0 0.0
    %1022 = vmatpush.msra.mxu0 0.0
    %1023 = vmatpush.msra.mxu0 %v1004
    %1024 = vmatpush.msra.mxu0 %v1003
    %1025 = vmatpush.msra.mxu0 %v1002
    %1026 = vmatpush.msra.mxu0 %v1001
    %1027 = vmatmul.f32.gmra.mxu0 %v1006
    %v1028 = vpop.f32.mrf.mxu0
    %v1029 = vadd.f32 0.0, %v1028
    %1030 = vmatmul.f32.gmra.mxu0 %v1009
    %v1031 = vpop.f32.mrf.mxu0
    %v1032 = vadd.f32 0.0, %v1031
    %1033 = vdwg.mxu0
    %1034 = vst.msk [vmem:[#allocation2] sm:$0xff] %vm31, %v1029
    %1035 = vst.msk [vmem:[#allocation2 + $0x8] sm:$0xff] %vm31, %v1032
    // Predicated region
    $region22: #{attention_forward.1} parent=1 // pred_check
      _
    $region23: #{attention_forward.1} parent=1 // pred_check_branch
      %1037 = sbr.rel (0) target = $region25
    $region24: #{attention_forward.1} parent=1 // pred_region
      %1039 = vsyncadd [#allocation3], 0
      %s1040 = sshll.u32 [#allocation2], 4
      %s1041 = int_to_ptr.vmem [resolvable:$true] %s1040
      %s1042 = sshll.u32 %s5, 4
      %s1043 = int_to_ptr.hbm [resolvable:$true] %s1042
      %1048 = dma.vmem_to_hbm [thread:$0]  %s1041, 256, %s1043, [#allocation3], 128, 128, 8
    $region25: #{attention_forward.1} parent=1 // pred_fallthru
      _
    // Predicated region
    $region26: #{attention_forward.1} parent=1 // pred_check
      _
    $region27: #{attention_forward.1} parent=1 // pred_check_branch
      %1050 = sbr.rel (0) target = $region29
    $region28: #{attention_forward.1} parent=1 // pred_region
      %1052 = dma.done [#allocation3], 256
    $region29: #{attention_forward.1} parent=1 // pred_fallthru
      _
    %1053 = vsyncpa [#allocation3], 1

</llo_original>
